<compile_context>
chip_gen: v7x
topology: tpu7x:2x2x1
jax: 0.10.0
libtpu: 0.0.40
codegen_flags: <defaults>
</compile_context>

<pallas_src>
import jax
import jax.numpy as jnp
from jax.experimental import pallas as pl
from jax.experimental.pallas import tpu as pltpu


# ----------------------------- kernel body ---------------------------------

def _mlp_kernel(x_ref, w1_ref, w2_ref, o_ref, h_ref):
    # First matmul on the MXU, f32 accumulation; stage the intermediate in the
    # compute dtype (bf16 on the bf16 path) to minimize VMEM traffic.
    h_ref[...] = jnp.dot(x_ref[...], w1_ref[...],
                         preferred_element_type=jnp.float32
                         ).astype(h_ref.dtype)
    # Second matmul: staged intermediate already in the MXU operand dtype,
    # f32 accumulation again.
    y = jnp.dot(h_ref[...], w2_ref[...],
                preferred_element_type=jnp.float32)
    # ReLU epilogue on the VPU (kept in f32), then cast to the output dtype.
    o_ref[...] = jnp.maximum(y, 0.0).astype(o_ref.dtype)


# ----------------------------- host wrapper --------------------------------

_LANE = 128                      # lane width: last-dim alignment target
_SUBLANE = 8                     # sublane alignment for row tiles
_VMEM_BUDGET = 48 * 1024 * 1024  # conservative: fits v7x's 64 MiB physical


def _round_up(n, m):
    return ((n + m - 1) // m) * m


def _pad_axis(a, axis, mult):
    pad = (-a.shape[axis]) % mult
    if pad == 0:
        return a
    widths = [(0, 0)] * a.ndim
    widths[axis] = (0, pad)
    return jnp.pad(a, widths)


def mlp_forward(x, w1, w2, *, tm=None, compute_dtype=None):
    """x: (B, dim), w1: (dim, hidden), w2: (hidden, out) -> (B, out).

    compute_dtype: optional MXU operand dtype (e.g. jnp.bfloat16). Accumulation
    is always f32; output keeps x's dtype.
    """
    B, dim = x.shape
    assert w1.shape[0] == dim
    hidden = w1.shape[1]
    assert w2.shape[0] == hidden
    out_dim = w2.shape[1]

    out_dtype = x.dtype
    cdt = compute_dtype if compute_dtype is not None else x.dtype
    cbytes = jnp.dtype(cdt).itemsize
    obytes = jnp.dtype(out_dtype).itemsize

    # --- lane-align feature dims with exact zero padding -------------------
    x_p = _pad_axis(x, 1, _LANE)
    w1_p = _pad_axis(_pad_axis(w1, 0, _LANE), 1, _LANE)
    w2_p = _pad_axis(_pad_axis(w2, 0, _LANE), 1, _LANE)
    dim_p, hid_p = w1_p.shape
    out_p = w2_p.shape[1]

    # --- cast MXU operands (accumulation stays f32 in-kernel) --------------
    x_p = x_p.astype(cdt)
    w1_p = w1_p.astype(cdt)
    w2_p = w2_p.astype(cdt)

    # --- choose the batch row tile against the VMEM budget -----------------
    # Weights are grid-invariant but the auto-pipeline still allocates two
    # buffers for them; x/out tiles are double-buffered; h scratch is in the
    # compute dtype.
    weight_bytes = (dim_p * hid_p + hid_p * out_p) * cbytes * 2

    def _tile_bytes(t):
        return (t * dim_p * cbytes * 2          # x tile, double-buffered
                + t * out_p * obytes * 2        # out tile, double-buffered
                + t * hid_p * cbytes)           # VMEM scratch for h

    if tm is None:
        tm = max(_SUBLANE, min(512, _round_up(B, _SUBLANE)))
        while tm > _SUBLANE and weight_bytes + _tile_bytes(tm) > _VMEM_BUDGET:
            tm = max(_SUBLANE, _round_up(tm // 2, _SUBLANE))
    assert tm % _SUBLANE == 0, "row tile must be a multiple of 8 sublanes"

    # --- pad the batch up to a multiple of the row tile --------------------
    B_p = _round_up(B, tm)
    x_p = _pad_axis(x_p, 0, tm)

    # Explicit VMEM limit so large row tiles don't hit the 32 MiB scoped
    # default; capped below physical VMEM of all generations.
    vmem_limit = min(
        max(32 * 1024 * 1024,
            int((weight_bytes + _tile_bytes(tm)) * 1.25) + (4 << 20)),
        100 * 1024 * 1024)

    cost = pl.CostEstimate(
        flops=2 * B_p * dim_p * hid_p + 2 * B_p * hid_p * out_p,
        transcendentals=0,
        bytes_accessed=(B_p * dim_p + dim_p * hid_p + hid_p * out_p) * cbytes
                       + B_p * out_p * obytes,
    )

    y_full = pl.pallas_call(
        _mlp_kernel,
        out_shape=jax.ShapeDtypeStruct((B_p, out_p), out_dtype),
        grid_spec=pltpu.PrefetchScalarGridSpec(
            num_scalar_prefetch=0,
            grid=(B_p // tm,),
            in_specs=[
                # stream row tiles of x; weights are grid-invariant (fetched
                # once by the pipeline and kept VMEM-resident)
                pl.BlockSpec((tm, dim_p), lambda i: (i, 0)),
                pl.BlockSpec((dim_p, hid_p), lambda i: (0, 0)),
                pl.BlockSpec((hid_p, out_p), lambda i: (0, 0)),
            ],
            out_specs=pl.BlockSpec((tm, out_p), lambda i: (i, 0)),
            scratch_shapes=[pltpu.VMEM((tm, hid_p), cdt)],
        ),
        compiler_params=pltpu.CompilerParams(
            dimension_semantics=("parallel",),
            vmem_limit_bytes=vmem_limit,
        ),
        cost_estimate=cost,
    )(x_p, w1_p, w2_p)

    # strip batch / lane padding
    return y_full[:B, :out_dim]


def mlp_reference(x, w1, w2, *, compute_dtype=None):
    """Pure-JAX reference with numerics matching the kernel's cast pattern."""
    cdt = compute_dtype if compute_dtype is not None else x.dtype
    h = jnp.dot(x.astype(cdt), w1.astype(cdt),
                preferred_element_type=jnp.float32)
    y = jnp.dot(h.astype(cdt), w2.astype(cdt),
                preferred_element_type=jnp.float32)
    return jnp.maximum(y, 0.0).astype(x.dtype)


# --------------------------------- test -------------------------------------

if __name__ == "__main__":
    key = jax.random.PRNGKey(0)
    kx, k1, k2 = jax.random.split(key, 3)

    # Small f32 config consistent with MLP(dim, hidden_dim, out_dim).
    B, dim, hidden_dim, out_dim = 8, 32, 64, 32
    x = jax.random.normal(kx, (B, dim), dtype=jnp.float32)
    b1 = 1.0 / jnp.sqrt(jnp.float32(dim))
    b2 = 1.0 / jnp.sqrt(jnp.float32(hidden_dim))
    w1 = jax.random.uniform(k1, (dim, hidden_dim), jnp.float32, -b1, b1)
    w2 = jax.random.uniform(k2, (hidden_dim, out_dim), jnp.float32, -b2, b2)

    y = jax.block_until_ready(mlp_forward(x, w1, w2))
    y_ref = mlp_reference(x, w1, w2)
    assert y.shape == (B, out_dim)
    assert jnp.allclose(y, y_ref, atol=1e-5, rtol=1e-5), "f32 mismatch vs reference"

    # Larger config exercising the wide-row-tile, lane-dense, bf16-MXU path.
    B2, d2, h2, o2 = 256, 128, 256, 128
    x2 = jax.random.normal(kx, (B2, d2), dtype=jnp.float32)
    s1 = 1.0 / jnp.sqrt(jnp.float32(d2))
    s2 = 1.0 / jnp.sqrt(jnp.float32(h2))
    w1b = jax.random.uniform(k1, (d2, h2), jnp.float32, -s1, s1)
    w2b = jax.random.uniform(k2, (h2, o2), jnp.float32, -s2, s2)

    y2 = jax.block_until_ready(
        mlp_forward(x2, w1b, w2b, compute_dtype=jnp.bfloat16))
    y2_ref = mlp_reference(x2, w1b, w2b, compute_dtype=jnp.bfloat16)
    assert y2.shape == (B2, o2)
    assert jnp.allclose(y2, y2_ref, atol=2e-2, rtol=2e-2), "bf16 mismatch vs reference"

    print("KERNEL_OK")
</pallas_src>

<mosaic_0001>
module attributes {stable_mosaic.version = 11 : i64} {
  func.func @_mlp_kernel(%arg0: i32, %arg1: memref<8x128xf32, #tpu.memory_space<vmem>>, %arg2: memref<128x128xf32, #tpu.memory_space<vmem>>, %arg3: memref<128x128xf32, #tpu.memory_space<vmem>>, %arg4: memref<8x128xf32, #tpu.memory_space<vmem>>, %arg5: memref<8x128xf32, #tpu.memory_space<vmem>>) attributes {dimension_semantics = [#tpu.dimension_semantics<parallel>], iteration_bounds = array<i64: 1>, scalar_prefetch = 0 : i64, scratch_operands = 1 : i64, tpu.core_type = #tpu.core_type<tc>, window_params = [{transform_indices = @transform_0, window_bounds = array<i64: 8, 128>}, {pipeline_mode = #tpu.pipeline_mode<synchronous>, transform_indices = @transform_1, window_bounds = array<i64: 128, 128>}, {pipeline_mode = #tpu.pipeline_mode<synchronous>, transform_indices = @transform_2, window_bounds = array<i64: 128, 128>}, {transform_indices = @transform_3, window_bounds = array<i64: 8, 128>}]} {
    %c0 = arith.constant 0 : index
    %c0_0 = arith.constant 0 : index
    %0 = vector.load %arg1[%c0, %c0_0] : memref<8x128xf32, #tpu.memory_space<vmem>>, vector<8x128xf32>
    %c0_1 = arith.constant 0 : index
    %c0_2 = arith.constant 0 : index
    %1 = vector.load %arg2[%c0_1, %c0_2] : memref<128x128xf32, #tpu.memory_space<vmem>>, vector<128x128xf32>
    %cst = arith.constant dense<0.000000e+00> : vector<8x128xf32>
    %2 = tpu.matmul %0, %1, %cst {dimension_numbers = #tpu.dot_dimension_numbers<[1], [0], [0], [1], [0, 0, 1, 1], [], []>} : vector<8x128xf32>, vector<128x128xf32>, vector<8x128xf32> -> vector<8x128xf32>
    %c0_3 = arith.constant 0 : index
    %c0_4 = arith.constant 0 : index
    %3 = vector.load %arg5[%c0_3, %c0_4] : memref<8x128xf32, #tpu.memory_space<vmem>>, vector<8x128xf32>
    tpu.vector_store %arg5[%c0_3, %c0_4], %2 {strides = array<i32>} : memref<8x128xf32, #tpu.memory_space<vmem>>, vector<8x128xf32>,
    %c0_5 = arith.constant 0 : index
    %c0_6 = arith.constant 0 : index
    %4 = vector.load %arg5[%c0_5, %c0_6] : memref<8x128xf32, #tpu.memory_space<vmem>>, vector<8x128xf32>
    %c0_7 = arith.constant 0 : index
    %c0_8 = arith.constant 0 : index
    %5 = vector.load %arg3[%c0_7, %c0_8] : memref<128x128xf32, #tpu.memory_space<vmem>>, vector<128x128xf32>
    %cst_9 = arith.constant dense<0.000000e+00> : vector<8x128xf32>
    %6 = tpu.matmul %4, %5, %cst_9 {dimension_numbers = #tpu.dot_dimension_numbers<[1], [0], [0], [1], [0, 0, 1, 1], [], []>} : vector<8x128xf32>, vector<128x128xf32>, vector<8x128xf32> -> vector<8x128xf32>
    %cst_10 = arith.constant 0.000000e+00 : f32
    %7 = vector.broadcast %cst_10 : f32 to vector<8x128xf32>
    %8 = arith.maximumf %6, %7 : vector<8x128xf32>
    %c0_11 = arith.constant 0 : index
    %c0_12 = arith.constant 0 : index
    %9 = vector.load %arg4[%c0_11, %c0_12] : memref<8x128xf32, #tpu.memory_space<vmem>>, vector<8x128xf32>
    tpu.vector_store %arg4[%c0_11, %c0_12], %8 {strides = array<i32>} : memref<8x128xf32, #tpu.memory_space<vmem>>, vector<8x128xf32>,
    return
  }
  func.func @transform_0(%arg0: i32) -> (i32, i32) {
    %c0_i32 = arith.constant 0 : i32
    %c0_i32_0 = arith.constant 0 : i32
    return %arg0, %c0_i32 : i32, i32
  }
  func.func @transform_1(%arg0: i32) -> (i32, i32) {
    %c0_i32 = arith.constant 0 : i32
    %c0_i32_0 = arith.constant 0 : i32
    %c0_i32_1 = arith.constant 0 : i32
    return %c0_i32, %c0_i32_0 : i32, i32
  }
  func.func @transform_2(%arg0: i32) -> (i32, i32) {
    %c0_i32 = arith.constant 0 : i32
    %c0_i32_0 = arith.constant 0 : i32
    %c0_i32_1 = arith.constant 0 : i32
    return %c0_i32, %c0_i32_0 : i32, i32
  }
  func.func @transform_3(%arg0: i32) -> (i32, i32) {
    %c0_i32 = arith.constant 0 : i32
    %c0_i32_0 = arith.constant 0 : i32
    return %arg0, %c0_i32 : i32, i32
  }
}

</mosaic_0001>

<llo_original>
// kernel: tpu_custom_call.1
$region0: #{tpu_custom_call.1}
  #allocation0 [shape = 'u32[]', space=smem, size = 0x4, offset = 0x4, fixed_abs, tag = 'smem constant byte address 0x4 - core index']
  #allocation1 [shape = 'u32[144,128]{1,0:T(1,128)}', space=vmem, size = 0x12000, scoped, tag = 'internal scratch']
  #allocation2 [shape = 'f32[8,128]{1,0:T(8,128)}', space=vmem, size = 0x1000, scoped, tag = 'scratch operand']
  %s0 = inlined_call_operand.hbm [shape: f32[8,128], index: 0, kind: input, shape index: {}]
  %s1 = inlined_call_operand.hbm [shape: f32[128,128], index: 1, kind: input, shape index: {}]
  %s2 = inlined_call_operand.hbm [shape: f32[128,128], index: 2, kind: input, shape index: {}]
  %s3 = inlined_call_operand.hbm [shape: f32[8,128], index: 3, kind: output, shape index: {}]
  %s4 = sld [smem:[#allocation0]]
  $region34: #{tpu_custom_call.1} parent=0
    _
  %s6 = ssub.s32 1, %s4
  %s7 = scalar_select 0, %s6, %s4
  $region1: #{tpu_custom_call.1} parent=0
    #allocation3 [shape = 'u8[4096]{0}', space=vmem, size = 0x1000, scoped, tag = 'input window, operand 0, single buffered']
    #allocation4 [shape = 's32[1]{0}', space=sflag, size = 0x4, scoped, tag = 'scoped memory for tpu_custom_call.1']
    #allocation5 [shape = 's32[1]{0}', space=sflag, size = 0x4, scoped, tag = 'scoped memory for tpu_custom_call.1']
    #allocation6 [shape = 'u8[65536]{0}', space=vmem, size = 0x10000, scoped, tag = 'input window, operand 1, single buffered']
    #allocation7 [shape = 's32[1]{0}', space=sflag, size = 0x4, scoped, tag = 'scoped memory for tpu_custom_call.1']
    #allocation8 [shape = 'u8[65536]{0}', space=vmem, size = 0x10000, scoped, tag = 'input window, operand 2, single buffered']
    #allocation9 [shape = 'u8[4096]{0}', space=vmem, size = 0x1000, scoped, tag = 'output window, operand 0, single buffered']
    %8 = vsyncpa [#allocation4], 0
    %9 = vsyncpa [#allocation7], 0
    %10 = vsyncpa [#allocation5], 0
    // Predicated region
    $region2: #{tpu_custom_call.1} parent=1 // pred_check
      _
    $region3: #{tpu_custom_call.1} parent=1 // pred_check_branch
      %12 = sbr.rel (0) target = $region5
    $region4: #{tpu_custom_call.1} parent=1 // pred_region
      %s14 = ssub.s32 128, 128
      %15 = vsyncadd [#allocation4], %s14
      %s17 = sshll.u32 [#allocation3], 4
      %s18 = int_to_ptr.vmem [resolvable:$true] %s17
      %20 = dma.hbm_to_vmem [thread:$0]  %s0, 128, %s18, [#allocation4]
    $region5: #{tpu_custom_call.1} parent=1 // pred_fallthru
      _
    // Predicated region
    $region6: #{tpu_custom_call.1} parent=1 // pred_check
      _
    $region7: #{tpu_custom_call.1} parent=1 // pred_check_branch
      %22 = sbr.rel (0) target = $region9
    $region8: #{tpu_custom_call.1} parent=1 // pred_region
      %s24 = ssub.s32 2048, 2048
      %25 = vsyncadd [#allocation7], %s24
      %s26 = sshll.u32 [#allocation6], 4
      %s27 = int_to_ptr.vmem [resolvable:$true] %s26
      %32 = dma.hbm_to_vmem [thread:$0]  %s1, 2048, %s27, [#allocation7], 128, 128, 8
    $region9: #{tpu_custom_call.1} parent=1 // pred_fallthru
      _
    // Predicated region
    $region10: #{tpu_custom_call.1} parent=1 // pred_check
      _
    $region11: #{tpu_custom_call.1} parent=1 // pred_check_branch
      %34 = sbr.rel (0) target = $region13
    $region12: #{tpu_custom_call.1} parent=1 // pred_region
      %s36 = ssub.s32 2048, 2048
      %37 = vsyncadd [#allocation7], %s36
      %s38 = sshll.u32 [#allocation8], 4
      %s39 = int_to_ptr.vmem [resolvable:$true] %s38
      %44 = dma.hbm_to_vmem [thread:$0]  %s2, 2048, %s39, [#allocation7], 128, 128, 8
    $region13: #{tpu_custom_call.1} parent=1 // pred_fallthru
      _
    // Predicated region
    $region14: #{tpu_custom_call.1} parent=1 // pred_check
      _
    $region15: #{tpu_custom_call.1} parent=1 // pred_check_branch
      %46 = sbr.rel (0) target = $region17
    $region16: #{tpu_custom_call.1} parent=1 // pred_region
      %47 = dma.done [#allocation4], 128
    $region17: #{tpu_custom_call.1} parent=1 // pred_fallthru
      _
    // Predicated region
    $region18: #{tpu_custom_call.1} parent=1 // pred_check
      _
    $region19: #{tpu_custom_call.1} parent=1 // pred_check_branch
      %49 = sbr.rel (0) target = $region21
    $region20: #{tpu_custom_call.1} parent=1 // pred_region
      %50 = dma.done [#allocation7], 2048
    $region21: #{tpu_custom_call.1} parent=1 // pred_fallthru
      _
    // Predicated region
    $region22: #{tpu_custom_call.1} parent=1 // pred_check
      _
    $region23: #{tpu_custom_call.1} parent=1 // pred_check_branch
      %52 = sbr.rel (0) target = $region25
    $region24: #{tpu_custom_call.1} parent=1 // pred_region
      %53 = dma.done [#allocation7], 2048
    $region25: #{tpu_custom_call.1} parent=1 // pred_fallthru
      _
    %v54 = vld [vmem:[#allocation3] sm:$0xff]
    %v55 = vld [vmem:[#allocation6] sm:$0xff]
    %v56 = vld [vmem:[#allocation6 + $0x8] sm:$0xff]
    %v57 = vld [vmem:[#allocation6 + $0x10] sm:$0xff]
    %v58 = vld [vmem:[#allocation6 + $0x18] sm:$0xff]
    %v59 = vld [vmem:[#allocation6 + $0x20] sm:$0xff]
    %v60 = vld [vmem:[#allocation6 + $0x28] sm:$0xff]
    %v61 = vld [vmem:[#allocation6 + $0x30] sm:$0xff]
    %v62 = vld [vmem:[#allocation6 + $0x38] sm:$0xff]
    %v63 = vld [vmem:[#allocation6 + $0x40] sm:$0xff]
    %v64 = vld [vmem:[#allocation6 + $0x48] sm:$0xff]
    %v65 = vld [vmem:[#allocation6 + $0x50] sm:$0xff]
    %v66 = vld [vmem:[#allocation6 + $0x58] sm:$0xff]
    %v67 = vld [vmem:[#allocation6 + $0x60] sm:$0xff]
    %v68 = vld [vmem:[#allocation6 + $0x68] sm:$0xff]
    %v69 = vld [vmem:[#allocation6 + $0x70] sm:$0xff]
    %v70 = vld [vmem:[#allocation6 + $0x78] sm:$0xff]
    %71 = vmatprep.subr.mxu0 0.0
    %72 = vmatpush1.msra.mxu0 %v55
    %73 = vmatprep.subr.mxu0 0.0
    %74 = vmatpush1.msra.mxu0 %v56
    %75 = vmatprep.subr.mxu0 0.0
    %76 = vmatpush1.msra.mxu0 %v57
    %77 = vmatprep.subr.mxu0 0.0
    %78 = vmatpush1.msra.mxu0 %v58
    %79 = vmatprep.subr.mxu0 0.0
    %80 = vmatpush1.msra.mxu0 %v59
    %81 = vmatprep.subr.mxu0 0.0
    %82 = vmatpush1.msra.mxu0 %v60
    %83 = vmatprep.subr.mxu0 0.0
    %84 = vmatpush1.msra.mxu0 %v61
    %85 = vmatprep.subr.mxu0 0.0
    %86 = vmatpush1.msra.mxu0 %v62
    %87 = vmatprep.subr.mxu0 0.0
    %88 = vmatpush1.msra.mxu0 %v63
    %89 = vmatprep.subr.mxu0 0.0
    %90 = vmatpush1.msra.mxu0 %v64
    %91 = vmatprep.subr.mxu0 0.0
    %92 = vmatpush1.msra.mxu0 %v65
    %93 = vmatprep.subr.mxu0 0.0
    %94 = vmatpush1.msra.mxu0 %v66
    %95 = vmatprep.subr.mxu0 0.0
    %96 = vmatpush1.msra.mxu0 %v67
    %97 = vmatprep.subr.mxu0 0.0
    %98 = vmatpush1.msra.mxu0 %v68
    %99 = vmatprep.subr.mxu0 0.0
    %100 = vmatpush1.msra.mxu0 %v69
    %101 = vmatprep.subr.mxu0 0.0
    %102 = vmatpush1.msra.mxu0 %v70
    %103 = vmatprep.subr.mxu0 0.0
    %104 = vmatpush1.msra.mxu0 0.0
    %105 = vmatprep.subr.mxu0 0.0
    %106 = vmatpush1.msra.mxu0 0.0
    %107 = vmatprep.subr.mxu0 0.0
    %108 = vmatpush1.msra.mxu0 0.0
    %109 = vmatprep.subr.mxu0 0.0
    %110 = vmatpush1.msra.mxu0 0.0
    %111 = vmatprep.subr.mxu0 0.0
    %112 = vmatpush1.msra.mxu0 0.0
    %113 = vmatprep.subr.mxu0 0.0
    %114 = vmatpush1.msra.mxu0 0.0
    %115 = vmatprep.subr.mxu0 0.0
    %116 = vmatpush1.msra.mxu0 0.0
    %117 = vmatprep.subr.mxu0 0.0
    %118 = vmatpush1.msra.mxu0 0.0
    %119 = vmatprep.subr.mxu0 0.0
    %120 = vmatpush1.msra.mxu0 0.0
    %121 = vmatprep.subr.mxu0 0.0
    %122 = vmatpush1.msra.mxu0 0.0
    %123 = vmatprep.subr.mxu0 0.0
    %124 = vmatpush1.msra.mxu0 0.0
    %125 = vmatprep.subr.mxu0 0.0
    %126 = vmatpush1.msra.mxu0 0.0
    %127 = vmatprep.subr.mxu0 0.0
    %128 = vmatpush1.msra.mxu0 0.0
    %129 = vmatprep.subr.mxu0 0.0
    %130 = vmatpush1.msra.mxu0 0.0
    %131 = vmatprep.subr.mxu0 0.0
    %132 = vmatpush1.msra.mxu0 0.0
    %133 = vmatprep.subr.mxu0 0.0
    %134 = vmatpush1.msra.mxu0 0.0
    %135 = vmatprep.mubr.f32.mxu0 0.0
    %136 = vmatmul.mubr.f32.gmra.mrb[0].mxu0 %v54
    %v137 = vpop.f32.mrb[0].mxu0
    %v138 = vadd.f32 0.0, %v137
    %v139 = vpop.f32.mrb[0].mxu0
    %140 = vdwg.mxu0
    %141 = vst [vmem:[#allocation2] sm:$0xff] %v138
    %v142 = vld [vmem:[#allocation2] sm:$0xff]
    %v143 = vld [vmem:[#allocation8] sm:$0xff]
    %v144 = vld [vmem:[#allocation8 + $0x8] sm:$0xff]
    %v145 = vld [vmem:[#allocation8 + $0x10] sm:$0xff]
    %v146 = vld [vmem:[#allocation8 + $0x18] sm:$0xff]
    %v147 = vld [vmem:[#allocation8 + $0x20] sm:$0xff]
    %v148 = vld [vmem:[#allocation8 + $0x28] sm:$0xff]
    %v149 = vld [vmem:[#allocation8 + $0x30] sm:$0xff]
    %v150 = vld [vmem:[#allocation8 + $0x38] sm:$0xff]
    %v151 = vld [vmem:[#allocation8 + $0x40] sm:$0xff]
    %v152 = vld [vmem:[#allocation8 + $0x48] sm:$0xff]
    %v153 = vld [vmem:[#allocation8 + $0x50] sm:$0xff]
    %v154 = vld [vmem:[#allocation8 + $0x58] sm:$0xff]
    %v155 = vld [vmem:[#allocation8 + $0x60] sm:$0xff]
    %v156 = vld [vmem:[#allocation8 + $0x68] sm:$0xff]
    %v157 = vld [vmem:[#allocation8 + $0x70] sm:$0xff]
    %v158 = vld [vmem:[#allocation8 + $0x78] sm:$0xff]
    %159 = vmatprep.subr.mxu0 0.0
    %160 = vmatpush1.msra.mxu0 %v143
    %161 = vmatprep.subr.mxu0 0.0
    %162 = vmatpush1.msra.mxu0 %v144
    %163 = vmatprep.subr.mxu0 0.0
    %164 = vmatpush1.msra.mxu0 %v145
    %165 = vmatprep.subr.mxu0 0.0
    %166 = vmatpush1.msra.mxu0 %v146
    %167 = vmatprep.subr.mxu0 0.0
    %168 = vmatpush1.msra.mxu0 %v147
    %169 = vmatprep.subr.mxu0 0.0
    %170 = vmatpush1.msra.mxu0 %v148
    %171 = vmatprep.subr.mxu0 0.0
    %172 = vmatpush1.msra.mxu0 %v149
    %173 = vmatprep.subr.mxu0 0.0
    %174 = vmatpush1.msra.mxu0 %v150
    %175 = vmatprep.subr.mxu0 0.0
    %176 = vmatpush1.msra.mxu0 %v151
    %177 = vmatprep.subr.mxu0 0.0
    %178 = vmatpush1.msra.mxu0 %v152
    %179 = vmatprep.subr.mxu0 0.0
    %180 = vmatpush1.msra.mxu0 %v153
    %181 = vmatprep.subr.mxu0 0.0
    %182 = vmatpush1.msra.mxu0 %v154
    %183 = vmatprep.subr.mxu0 0.0
    %184 = vmatpush1.msra.mxu0 %v155
    %185 = vmatprep.subr.mxu0 0.0
    %186 = vmatpush1.msra.mxu0 %v156
    %187 = vmatprep.subr.mxu0 0.0
    %188 = vmatpush1.msra.mxu0 %v157
    %189 = vmatprep.subr.mxu0 0.0
    %190 = vmatpush1.msra.mxu0 %v158
    %191 = vmatprep.subr.mxu0 0.0
    %192 = vmatpush1.msra.mxu0 0.0
    %193 = vmatprep.subr.mxu0 0.0
    %194 = vmatpush1.msra.mxu0 0.0
    %195 = vmatprep.subr.mxu0 0.0
    %196 = vmatpush1.msra.mxu0 0.0
    %197 = vmatprep.subr.mxu0 0.0
    %198 = vmatpush1.msra.mxu0 0.0
    %199 = vmatprep.subr.mxu0 0.0
    %200 = vmatpush1.msra.mxu0 0.0
    %201 = vmatprep.subr.mxu0 0.0
    %202 = vmatpush1.msra.mxu0 0.0
    %203 = vmatprep.subr.mxu0 0.0
    %204 = vmatpush1.msra.mxu0 0.0
    %205 = vmatprep.subr.mxu0 0.0
    %206 = vmatpush1.msra.mxu0 0.0
    %207 = vmatprep.subr.mxu0 0.0
    %208 = vmatpush1.msra.mxu0 0.0
    %209 = vmatprep.subr.mxu0 0.0
    %210 = vmatpush1.msra.mxu0 0.0
    %211 = vmatprep.subr.mxu0 0.0
    %212 = vmatpush1.msra.mxu0 0.0
    %213 = vmatprep.subr.mxu0 0.0
    %214 = vmatpush1.msra.mxu0 0.0
    %215 = vmatprep.subr.mxu0 0.0
    %216 = vmatpush1.msra.mxu0 0.0
    %217 = vmatprep.subr.mxu0 0.0
    %218 = vmatpush1.msra.mxu0 0.0
    %219 = vmatprep.subr.mxu0 0.0
    %220 = vmatpush1.msra.mxu0 0.0
    %221 = vmatprep.subr.mxu0 0.0
    %222 = vmatpush1.msra.mxu0 0.0
    %223 = vmatprep.mubr.f32.mxu0 0.0
    %224 = vmatmul.mubr.f32.gmra.mrb[0].mxu0 %v142
    %v225 = vpop.f32.mrb[0].mxu0
    %v226 = vadd.f32 0.0, %v225
    %v227 = vpop.f32.mrb[0].mxu0
    %228 = vdwg.mxu0
    %v229 = vmax.f32 %v226, 0.0
    %230 = vst [vmem:[#allocation9] sm:$0xff] %v229
    // Predicated region
    $region26: #{tpu_custom_call.1} parent=1 // pred_check
      _
    $region27: #{tpu_custom_call.1} parent=1 // pred_check_branch
      %232 = sbr.rel (0) target = $region29
    $region28: #{tpu_custom_call.1} parent=1 // pred_region
      %s234 = ssub.s32 128, 128
      %235 = vsyncadd [#allocation5], %s234
      %s237 = sshll.u32 [#allocation9], 4
      %s238 = int_to_ptr.vmem [resolvable:$true] %s237
      %240 = dma.vmem_to_hbm [thread:$0]  %s238, 128, %s3, [#allocation5]
    $region29: #{tpu_custom_call.1} parent=1 // pred_fallthru
      _
    // Predicated region
    $region30: #{tpu_custom_call.1} parent=1 // pred_check
      _
    $region31: #{tpu_custom_call.1} parent=1 // pred_check_branch
      %242 = sbr.rel (0) target = $region33
    $region32: #{tpu_custom_call.1} parent=1 // pred_region
      %243 = dma.done [#allocation5], 128
    $region33: #{tpu_custom_call.1} parent=1 // pred_fallthru
      _
    %244 = vsyncpa [#allocation4], 1
    %245 = vsyncpa [#allocation7], 1
    %246 = vsyncpa [#allocation5], 1

</llo_original>
